<compile_context>
chip_gen: v7x
topology: tpu7x:2x2x1
jax: 0.10.0
libtpu: 0.0.40
codegen_flags: <defaults>
</compile_context>

<pallas_src>
import functools
import math

import jax
import jax.numpy as jnp
from jax.experimental import pallas as pl
from jax.experimental.pallas import tpu as pltpu


def linear_bucket_kernel(w_ref, x_ref, h_ref, q_ref, hn_ref):
    sw = jax.nn.sigmoid(w_ref[...].astype(jnp.float32))   # (1, L)  EUP
    x = x_ref[...].astype(jnp.float32)                     # (br, L)
    h = h_ref[...].astype(jnp.float32)                     # (br, L)
    s = x + h
    q = s * sw
    hn = s - q                                              # == h - q + x
    q_ref[...] = q.astype(q_ref.dtype)
    hn_ref[...] = hn.astype(hn_ref.dtype)


def _fold_factor(nh):
    """Smallest f such that f * nh is a multiple of 128 (lane-dense layout)."""
    if nh % 128 == 0:
        return 1
    return 128 // math.gcd(nh, 128)


@functools.partial(jax.jit, static_argnames=("bn",))
def _linear_bucket_impl(wk, x, h, *, bn):
    N, nh = x.shape
    dtype = jnp.result_type(x.dtype, h.dtype)
    itemsize = jnp.dtype(dtype).itemsize

    # ---- lane-dense folding: (N, nh) -> (Nf, L) with L a multiple of 128 ----
    f = _fold_factor(nh)
    L = f * nh

    # ---- pick block rows from a VMEM budget (x, h, q, hn double-buffered) ---
    budget_bytes = 12 * 1024 * 1024                      # safe on v5e/v6e/v7x
    max_rows = max(8, budget_bytes // (8 * L * itemsize))
    max_rows = max(8, (max_rows // 8) * 8)
    bn_eff = max(8, (min(bn, max_rows) // 8) * 8)

    # ---- pad batch so it folds evenly and tiles evenly ----------------------
    Nf = -(-N // f)                                       # ceil(N / f)
    if Nf <= bn_eff:
        br = Nf                                           # single full-height block
        Nf_pad = Nf
    else:
        br = bn_eff
        Nf_pad = -(-Nf // br) * br
    N_pad = Nf_pad * f

    def prep(a):
        a = a.astype(dtype)
        if N_pad != N:
            a = jnp.pad(a, ((0, N_pad - N), (0, 0)))
        return a.reshape(Nf_pad, L)

    xf = prep(x)
    hf = prep(h)
    # wf[0, j] = wk[j % nh]  (matches the fold layout of xf / hf rows)
    wf = jnp.tile(wk.astype(dtype).reshape(1, nh), (1, f))

    grid = (Nf_pad // br,)

    q_f, hn_f = pl.pallas_call(
        linear_bucket_kernel,
        out_shape=(
            jax.ShapeDtypeStruct((Nf_pad, L), dtype),
            jax.ShapeDtypeStruct((Nf_pad, L), dtype),
        ),
        grid=grid,
        in_specs=[
            pl.BlockSpec((1, L), lambda i: (0, 0)),       # wk (resident)
            pl.BlockSpec((br, L), lambda i: (i, 0)),      # x
            pl.BlockSpec((br, L), lambda i: (i, 0)),      # h
        ],
        out_specs=(
            pl.BlockSpec((br, L), lambda i: (i, 0)),      # q
            pl.BlockSpec((br, L), lambda i: (i, 0)),      # hn
        ),
        input_output_aliases={1: 0, 2: 1},                # x -> q, h -> hn buffers
        compiler_params=pltpu.CompilerParams(
            dimension_semantics=("parallel",),
            vmem_limit_bytes=32 * 1024 * 1024,
        ),
    )(wf, xf, hf)

    q = q_f.reshape(N_pad, nh)[:N]
    hn = hn_f.reshape(N_pad, nh)[:N]
    return q, hn


def linear_bucket_forward(wk, x, h, *, bn=1024):
    """wk: (nh,), x: (N, nh), h: (N, nh). Returns (q, hn), each (N, nh)."""
    return _linear_bucket_impl(wk, x, h, bn=bn)


def linear_bucket_ref(wk, x, h):
    """Pure-JAX reference mirroring the PyTorch code literally."""
    q = (x + h) * jax.nn.sigmoid(wk)
    hn = h - q + x
    return q, hn


if __name__ == "__main__":
    nh = 32    # hidden buckets
    N = 16     # batch rows (sites / timesteps)

    key = jax.random.PRNGKey(0)
    kw, kx, kh = jax.random.split(key, 3)

    # reset_parameters(): wk ~ uniform(-1, 1)
    wk = jax.random.uniform(kw, (nh,), jnp.float32, minval=-1.0, maxval=1.0)
    x = jax.random.uniform(kx, (N, nh), jnp.float32, minval=0.0, maxval=10.0)
    h = jax.random.uniform(kh, (N, nh), jnp.float32, minval=0.0, maxval=5.0)

    q, hn = linear_bucket_forward(wk, x, h)
    jax.block_until_ready((q, hn))

    q_ref, hn_ref = linear_bucket_ref(wk, x, h)
    assert q.shape == (N, nh) and hn.shape == (N, nh)
    assert jnp.allclose(q, q_ref, atol=1e-5, rtol=1e-5)
    assert jnp.allclose(hn, hn_ref, atol=1e-5, rtol=1e-5)

    # also exercise a larger, non-aligned shape to hit the multi-block path
    N2 = 3000
    kx2, kh2 = jax.random.split(kh, 2)
    x2 = jax.random.uniform(kx2, (N2, nh), jnp.float32, minval=0.0, maxval=10.0)
    h2 = jax.random.uniform(kh2, (N2, nh), jnp.float32, minval=0.0, maxval=5.0)
    q2, hn2 = linear_bucket_forward(wk, x2, h2, bn=512)
    jax.block_until_ready((q2, hn2))
    q2_ref, hn2_ref = linear_bucket_ref(wk, x2, h2)
    assert jnp.allclose(q2, q2_ref, atol=1e-5, rtol=1e-5)
    assert jnp.allclose(hn2, hn2_ref, atol=1e-5, rtol=1e-5)

    print("KERNEL_OK")
</pallas_src>

<mosaic_0001>
module attributes {stable_mosaic.version = 11 : i64} {
  func.func @linear_bucket_kernel(%arg0: i32, %arg1: memref<1x128xf32, #tpu.memory_space<vmem>>, %arg2: memref<4x128xf32, #tpu.memory_space<vmem>>, %arg3: memref<4x128xf32, #tpu.memory_space<vmem>>, %arg4: memref<4x128xf32, #tpu.memory_space<vmem>>, %arg5: memref<4x128xf32, #tpu.memory_space<vmem>>) attributes {dimension_semantics = [#tpu.dimension_semantics<parallel>], iteration_bounds = array<i64: 1>, scalar_prefetch = 0 : i64, scratch_operands = 0 : i64, tpu.core_type = #tpu.core_type<tc>, window_params = [{pipeline_mode = #tpu.pipeline_mode<synchronous>, transform_indices = @transform_0, window_bounds = array<i64: 1, 128>}, {transform_indices = @transform_1, window_bounds = array<i64: 4, 128>}, {transform_indices = @transform_2, window_bounds = array<i64: 4, 128>}, {transform_indices = @transform_3, window_bounds = array<i64: 4, 128>}, {transform_indices = @transform_4, window_bounds = array<i64: 4, 128>}]} {
    %c0 = arith.constant 0 : index
    %c0_0 = arith.constant 0 : index
    %0 = vector.load %arg1[%c0, %c0_0] : memref<1x128xf32, #tpu.memory_space<vmem>>, vector<1x128xf32>
    %1 = arith.negf %0 : vector<1x128xf32>
    %2 = math.exp %1 : vector<1x128xf32>
    %cst = arith.constant 1.000000e+00 : f32
    %3 = vector.broadcast %cst : f32 to vector<1x128xf32>
    %4 = arith.addf %3, %2 : vector<1x128xf32>
    %5 = arith.divf %3, %4 : vector<1x128xf32>
    %c0_1 = arith.constant 0 : index
    %c0_2 = arith.constant 0 : index
    %6 = vector.load %arg2[%c0_1, %c0_2] : memref<4x128xf32, #tpu.memory_space<vmem>>, vector<4x128xf32>
    %c0_3 = arith.constant 0 : index
    %c0_4 = arith.constant 0 : index
    %7 = vector.load %arg3[%c0_3, %c0_4] : memref<4x128xf32, #tpu.memory_space<vmem>>, vector<4x128xf32>
    %8 = arith.addf %6, %7 : vector<4x128xf32>
    %9 = vector.broadcast %5 : vector<1x128xf32> to vector<4x128xf32>
    %10 = arith.mulf %8, %9 : vector<4x128xf32>
    %11 = arith.subf %8, %10 : vector<4x128xf32>
    %c0_5 = arith.constant 0 : index
    %c0_6 = arith.constant 0 : index
    %12 = vector.load %arg4[%c0_5, %c0_6] : memref<4x128xf32, #tpu.memory_space<vmem>>, vector<4x128xf32>
    tpu.vector_store %arg4[%c0_5, %c0_6], %10 {strides = array<i32>} : memref<4x128xf32, #tpu.memory_space<vmem>>, vector<4x128xf32>,
    %c0_7 = arith.constant 0 : index
    %c0_8 = arith.constant 0 : index
    %13 = vector.load %arg5[%c0_7, %c0_8] : memref<4x128xf32, #tpu.memory_space<vmem>>, vector<4x128xf32>
    tpu.vector_store %arg5[%c0_7, %c0_8], %11 {strides = array<i32>} : memref<4x128xf32, #tpu.memory_space<vmem>>, vector<4x128xf32>,
    return
  }
  func.func @transform_0(%arg0: i32) -> (i32, i32) {
    %c0_i32 = arith.constant 0 : i32
    %c0_i32_0 = arith.constant 0 : i32
    %c0_i32_1 = arith.constant 0 : i32
    return %c0_i32, %c0_i32_0 : i32, i32
  }
  func.func @transform_1(%arg0: i32) -> (i32, i32) {
    %c0_i32 = arith.constant 0 : i32
    %c0_i32_0 = arith.constant 0 : i32
    return %arg0, %c0_i32 : i32, i32
  }
  func.func @transform_2(%arg0: i32) -> (i32, i32) {
    %c0_i32 = arith.constant 0 : i32
    %c0_i32_0 = arith.constant 0 : i32
    return %arg0, %c0_i32 : i32, i32
  }
  func.func @transform_3(%arg0: i32) -> (i32, i32) {
    %c0_i32 = arith.constant 0 : i32
    %c0_i32_0 = arith.constant 0 : i32
    return %arg0, %c0_i32 : i32, i32
  }
  func.func @transform_4(%arg0: i32) -> (i32, i32) {
    %c0_i32 = arith.constant 0 : i32
    %c0_i32_0 = arith.constant 0 : i32
    return %arg0, %c0_i32 : i32, i32
  }
}

</mosaic_0001>

<llo_original>
// kernel: _linear_bucket_impl.1
$region0: #{_linear_bucket_impl.1}
  #allocation0 [shape = 'u32[]', space=smem, size = 0x4, offset = 0x4, fixed_abs, tag = 'smem constant byte address 0x4 - core index']
  #allocation1 [shape = 'u32[144,128]{1,0:T(1,128)}', space=vmem, size = 0x12000, scoped, tag = 'internal scratch']
  %s0 = inlined_call_operand.vmem [shape: f32[1,128], index: 0, kind: input, shape index: {}]
  %s1 = inlined_call_operand.vmem [shape: f32[4,128], index: 1, kind: input, shape index: {}, may-alias: {1,3}]
  %s2 = inlined_call_operand.vmem [shape: f32[4,128], index: 2, kind: input, shape index: {}, may-alias: {2,4}]
  %s3 = inlined_call_operand.vmem [shape: f32[4,128], index: 3, kind: output, shape index: {0}, may-alias: {1,3}]
  %s4 = inlined_call_operand.vmem [shape: f32[4,128], index: 4, kind: output, shape index: {1}, may-alias: {2,4}]
  %5 = xla_tuple %s3, %s4
  %s6 = sld [smem:[#allocation0]]
  $region30: #{_linear_bucket_impl.1} parent=0
    _
  %s8 = ssub.s32 1, %s6
  %s9 = scalar_select 0, %s8, %s6
  // Predicated region
  $region2: #{_linear_bucket_impl.1} parent=0 // pred_check
    _
  $region3: #{_linear_bucket_impl.1} parent=0 // pred_check_branch
    %11 = sbr.rel (0) target = $region5
  $region4: #{_linear_bucket_impl.1} parent=0 // pred_region
    _
  $region5: #{_linear_bucket_impl.1} parent=0 // pred_fallthru
    _
  // Predicated region
  $region6: #{_linear_bucket_impl.1} parent=0 // pred_check
    _
  $region7: #{_linear_bucket_impl.1} parent=0 // pred_check_branch
    %13 = sbr.rel (0) target = $region9
  $region8: #{_linear_bucket_impl.1} parent=0 // pred_region
    _
  $region9: #{_linear_bucket_impl.1} parent=0 // pred_fallthru
    _
  // Predicated region
  $region10: #{_linear_bucket_impl.1} parent=0 // pred_check
    _
  $region11: #{_linear_bucket_impl.1} parent=0 // pred_check_branch
    %15 = sbr.rel (0) target = $region13
  $region12: #{_linear_bucket_impl.1} parent=0 // pred_region
    _
  $region13: #{_linear_bucket_impl.1} parent=0 // pred_fallthru
    _
  %v16 = vld [vmem:[%s0] sm:$0x1]
  %v17 = vxor.u32 %v16, 2147483648
  %v18 = vmul.f32 %v17, 1.442695
  %v19 = vpow.pop %v18
  %v20 = vadd.f32 %v19, 1.0
  %v21 = vrcp.pop %v20
  %v22 = vmul.f32 1.0, %v21
  %v23 = vld [vmem:[%s1] sm:$0xf]
  %v24 = vld [vmem:[%s2] sm:$0xf]
  %v25 = vadd.f32 %v23, %v24
  %v27 = vlaneseq
  %v28 = vshrl.u32 %v27, 7
  %v29 = vsub.s32 0, %v28
  %v30 = vrot.slane %v22, %v29
  %v32 = vmul.f32 %v25, %v30
  %v33 = vsub.f32 %v25, %v32
  %34 = vst [vmem:[%s3] sm:$0xf] %v32
  %35 = vst [vmem:[%s4] sm:$0xf] %v33
  // Predicated region
  $region14: #{_linear_bucket_impl.1} parent=0 // pred_check
    _
  $region15: #{_linear_bucket_impl.1} parent=0 // pred_check_branch
    %37 = sbr.rel (0) target = $region17
  $region16: #{_linear_bucket_impl.1} parent=0 // pred_region
    _
  $region17: #{_linear_bucket_impl.1} parent=0 // pred_fallthru
    _
  // Predicated region
  $region18: #{_linear_bucket_impl.1} parent=0 // pred_check
    _
  $region19: #{_linear_bucket_impl.1} parent=0 // pred_check_branch
    %39 = sbr.rel (0) target = $region21
  $region20: #{_linear_bucket_impl.1} parent=0 // pred_region
    _
  $region21: #{_linear_bucket_impl.1} parent=0 // pred_fallthru
    _
  // Predicated region
  $region22: #{_linear_bucket_impl.1} parent=0 // pred_check
    _
  $region23: #{_linear_bucket_impl.1} parent=0 // pred_check_branch
    %41 = sbr.rel (0) target = $region25
  $region24: #{_linear_bucket_impl.1} parent=0 // pred_region
    _
  $region25: #{_linear_bucket_impl.1} parent=0 // pred_fallthru
    _
  // Predicated region
  $region26: #{_linear_bucket_impl.1} parent=0 // pred_check
    _
  $region27: #{_linear_bucket_impl.1} parent=0 // pred_check_branch
    %43 = sbr.rel (0) target = $region29
  $region28: #{_linear_bucket_impl.1} parent=0 // pred_region
    _
  $region29: #{_linear_bucket_impl.1} parent=0 // pred_fallthru
    _

</llo_original>
